<compile_context>
chip_gen: v5e
topology: v5e:2x2
jax: 0.10.0
libtpu: 0.0.40
codegen_flags: <defaults>
</compile_context>

<pallas_src>
import math
import functools

import jax
import jax.numpy as jnp
from jax import lax
from jax.experimental import pallas as pl
from jax.experimental.pallas import tpu as pltpu


def _round_up(v, m):
    return ((v + m - 1) // m) * m


def _euclidean_kernel(x_ref, w_ref, nwsq_ref, nxsq_ref, o_ref, acc_ref, *, two_inv_f):
    # Grid: (batch tile i, class tile j, feature tile k); k is the reduction.
    k = pl.program_id(2)

    @pl.when(k == 0)
    def _init():
        acc_ref[...] = jnp.zeros_like(acc_ref)

    # MXU: contract feature dim of x (dim 1) against feature dim of w (dim 1)
    # in the weight's native (C, F) layout -- no transpose materialized.
    acc_ref[...] += lax.dot_general(
        x_ref[...], w_ref[...],
        dimension_numbers=(((1,), (1,)), ((), ())),
        preferred_element_type=jnp.float32,
    )

    @pl.when(k == pl.num_programs(2) - 1)
    def _finalize():
        # out = (2/F)*x.w - (1/F)*||x||^2 - (1/F)*||w||^2
        # nxsq_ref: (tb, 1) column of -(1/F)*||x_b||^2
        # nwsq_ref: (1, tc) row    of -(1/F)*||w_c||^2
        o_ref[...] = (two_inv_f * acc_ref[...]
                      + nxsq_ref[...]
                      + nwsq_ref[...]).astype(o_ref.dtype)


def euclidean_forward(x, weight, *, tile_b=None, tile_c=None, tile_f=None):
    """Pallas forward for the Euclidean head.

    x:      (B, F)
    weight: (C, F)  (torch.nn.Linear.weight layout)
    returns (B, C) with out[b, c] = -mean_f (x[b, f] - weight[c, f])^2
    """
    B, F = x.shape
    C, F2 = weight.shape
    assert F == F2, "feature dims of x and weight must match"

    # ---- tile selection (MXU-native where possible, no ragged-batch assert) --
    if tile_b is None:
        tile_b = min(256, _round_up(B, 8))       # sublane multiple, <=256
    if tile_c is None:
        tile_c = min(256, _round_up(C, 128))     # lane-dense output, <=256
    if tile_f is None:
        tile_f = min(512, _round_up(F, 128))     # lane multiple on contraction

    Bp = _round_up(B, tile_b)
    Cp = _round_up(C, tile_c)
    Fp = _round_up(F, tile_f)

    # Zero padding is exact: padded features add 0 to both x.w and the norms
    # (and the mean is taken with the ORIGINAL F); padded batch rows / class
    # columns are sliced off below.
    if (Bp, Fp) != (B, F):
        x = jnp.pad(x, ((0, Bp - B), (0, Fp - F)))
    if (Cp, Fp) != (C, F):
        weight = jnp.pad(weight, ((0, Cp - C), (0, Fp - F)))

    inv_f = 1.0 / F

    # Hoisted once (single cheap pass each, outside the hot B*C*F loop):
    #   -(1/F)*||w_c||^2 as a lane-major (1, Cp) row,
    #   -(1/F)*||x_b||^2 as a (Bp, 1) column.
    wf = weight.astype(jnp.float32)
    neg_wsq = (-inv_f) * jnp.sum(wf * wf, axis=-1).reshape(1, Cp)
    xf = x.astype(jnp.float32)
    neg_xsq = (-inv_f) * jnp.sum(xf * xf, axis=-1).reshape(Bp, 1)

    grid = (Bp // tile_b, Cp // tile_c, Fp // tile_f)
    kernel = functools.partial(_euclidean_kernel, two_inv_f=2.0 * inv_f)

    # VMEM budget (double-buffered blocks + scratch), with headroom; keeps us
    # honest on v7x's 64 MiB per-core VMEM.
    x_isz = jnp.dtype(x.dtype).itemsize
    w_isz = jnp.dtype(weight.dtype).itemsize
    o_isz = jnp.dtype(x.dtype).itemsize
    needed = (2 * tile_b * tile_f * x_isz        # x block
              + 2 * tile_c * tile_f * w_isz      # weight block
              + 2 * tile_c * 4                   # neg_wsq row
              + 2 * tile_b * 4                   # neg_xsq column
              + 2 * tile_b * tile_c * o_isz      # output block
              + tile_b * tile_c * 4)             # f32 scratch accumulator
    vmem_limit = int(min(max(4 * needed, 8 * 1024 * 1024), 48 * 1024 * 1024))

    out_padded = pl.pallas_call(
        kernel,
        out_shape=jax.ShapeDtypeStruct((Bp, Cp), x.dtype),
        grid_spec=pltpu.PrefetchScalarGridSpec(
            num_scalar_prefetch=0,
            grid=grid,
            in_specs=[
                pl.BlockSpec((tile_b, tile_f), lambda i, j, k: (i, k)),  # x
                pl.BlockSpec((tile_c, tile_f), lambda i, j, k: (j, k)),  # weight
                pl.BlockSpec((1, tile_c), lambda i, j, k: (0, j)),       # -||w||^2/F
                pl.BlockSpec((tile_b, 1), lambda i, j, k: (i, 0)),       # -||x||^2/F
            ],
            out_specs=pl.BlockSpec((tile_b, tile_c), lambda i, j, k: (i, j)),
            scratch_shapes=[
                pltpu.VMEM((tile_b, tile_c), jnp.float32),  # matmul accumulator
            ],
        ),
        compiler_params=pltpu.CompilerParams(
            dimension_semantics=("parallel", "parallel", "arbitrary"),
            vmem_limit_bytes=vmem_limit,
        ),
    )(x, weight, neg_wsq, neg_xsq)

    return out_padded[:B, :C]


def euclidean_reference(x, weight):
    # Direct transcription of the PyTorch forward (for verification).
    xe = x[:, :, None]                 # (B, F, 1)
    h = weight.T[None, :, :]           # (1, F, C)
    return -jnp.mean((xe - h) ** 2, axis=1)   # (B, C)


if __name__ == "__main__":
    key = jax.random.PRNGKey(0)
    k_x, k_w = jax.random.split(key)

    B, in_features, num_classes = 8, 32, 16

    x = jax.random.normal(k_x, (B, in_features), dtype=jnp.float32)

    # kaiming_normal_(nonlinearity='relu'): std = sqrt(2 / fan_in), fan_in = in_features
    std = math.sqrt(2.0 / in_features)
    weight = std * jax.random.normal(k_w, (num_classes, in_features), dtype=jnp.float32)

    out = euclidean_forward(x, weight)
    out = jax.block_until_ready(out)

    ref = euclidean_reference(x, weight)
    assert out.shape == (B, num_classes)
    assert jnp.allclose(out, ref, atol=1e-4, rtol=1e-4), "mismatch vs reference"

    print("KERNEL_OK")
</pallas_src>

<mosaic_0001>
module attributes {stable_mosaic.version = 11 : i64} {
  func.func @_euclidean_kernel(%arg0: i32, %arg1: i32, %arg2: i32, %arg3: memref<8x128xf32, #tpu.memory_space<vmem>>, %arg4: memref<128x128xf32, #tpu.memory_space<vmem>>, %arg5: memref<1x128xf32, #tpu.memory_space<vmem>>, %arg6: memref<8x1xf32, #tpu.memory_space<vmem>>, %arg7: memref<8x128xf32, #tpu.memory_space<vmem>>, %arg8: memref<8x128xf32, #tpu.memory_space<vmem>>) attributes {dimension_semantics = [#tpu.dimension_semantics<parallel>, #tpu.dimension_semantics<parallel>, #tpu.dimension_semantics<arbitrary>], iteration_bounds = array<i64: 1, 1, 1>, scalar_prefetch = 0 : i64, scratch_operands = 1 : i64, tpu.core_type = #tpu.core_type<tc>, window_params = [{transform_indices = @transform_0, window_bounds = array<i64: 8, 128>}, {transform_indices = @transform_1, window_bounds = array<i64: 128, 128>}, {transform_indices = @transform_2, window_bounds = array<i64: 1, 128>}, {transform_indices = @transform_3, window_bounds = array<i64: 8, 1>}, {transform_indices = @transform_4, window_bounds = array<i64: 8, 128>}]} {
    %c0_i32 = arith.constant 0 : i32
    %0 = arith.cmpi eq, %arg2, %c0_i32 : i32
    %1 = arith.extui %0 : i1 to i32
    %c0_i32_0 = arith.constant 0 : i32
    %2 = arith.cmpi ne, %1, %c0_i32_0 : i32
    scf.if %2 {
      %cst_10 = arith.constant 0.000000e+00 : f32
      %12 = vector.broadcast %cst_10 : f32 to vector<8x128xf32>
      %c0_11 = arith.constant 0 : index
      %c0_12 = arith.constant 0 : index
      %13 = vector.load %arg8[%c0_11, %c0_12] : memref<8x128xf32, #tpu.memory_space<vmem>>, vector<8x128xf32>
      tpu.vector_store %arg8[%c0_11, %c0_12], %12 {strides = array<i32>} : memref<8x128xf32, #tpu.memory_space<vmem>>, vector<8x128xf32>,
    } else {
    }
    %c0 = arith.constant 0 : index
    %c0_1 = arith.constant 0 : index
    %3 = vector.load %arg8[%c0, %c0_1] : memref<8x128xf32, #tpu.memory_space<vmem>>, vector<8x128xf32>
    %c0_2 = arith.constant 0 : index
    %c0_3 = arith.constant 0 : index
    %4 = vector.load %arg3[%c0_2, %c0_3] : memref<8x128xf32, #tpu.memory_space<vmem>>, vector<8x128xf32>
    %c0_4 = arith.constant 0 : index
    %c0_5 = arith.constant 0 : index
    %5 = vector.load %arg4[%c0_4, %c0_5] : memref<128x128xf32, #tpu.memory_space<vmem>>, vector<128x128xf32>
    %cst = arith.constant dense<0.000000e+00> : vector<8x128xf32>
    %6 = tpu.matmul %4, %5, %cst {dimension_numbers = #tpu.dot_dimension_numbers<[1], [1], [0], [0], [0, 0, 1, 0], [], []>} : vector<8x128xf32>, vector<128x128xf32>, vector<8x128xf32> -> vector<8x128xf32>
    %7 = arith.addf %3, %6 : vector<8x128xf32>
    %c0_6 = arith.constant 0 : index
    %c0_7 = arith.constant 0 : index
    %8 = vector.load %arg8[%c0_6, %c0_7] : memref<8x128xf32, #tpu.memory_space<vmem>>, vector<8x128xf32>
    tpu.vector_store %arg8[%c0_6, %c0_7], %7 {strides = array<i32>} : memref<8x128xf32, #tpu.memory_space<vmem>>, vector<8x128xf32>,
    %c0_i32_8 = arith.constant 0 : i32
    %9 = arith.cmpi eq, %arg2, %c0_i32_8 : i32
    %10 = arith.extui %9 : i1 to i32
    %c0_i32_9 = arith.constant 0 : i32
    %11 = arith.cmpi ne, %10, %c0_i32_9 : i32
    scf.if %11 {
      %c0_10 = arith.constant 0 : index
      %c0_11 = arith.constant 0 : index
      %12 = vector.load %arg8[%c0_10, %c0_11] : memref<8x128xf32, #tpu.memory_space<vmem>>, vector<8x128xf32>
      %cst_12 = arith.constant 6.250000e-02 : f32
      %13 = vector.broadcast %cst_12 : f32 to vector<8x128xf32>
      %14 = arith.mulf %13, %12 : vector<8x128xf32>
      %c0_13 = arith.constant 0 : index
      %c0_14 = arith.constant 0 : index
      %15 = vector.load %arg6[%c0_13, %c0_14] : memref<8x1xf32, #tpu.memory_space<vmem>>, vector<8x1xf32>
      %16 = vector.broadcast %15 : vector<8x1xf32> to vector<8x128xf32>
      %17 = arith.addf %14, %16 : vector<8x128xf32>
      %c0_15 = arith.constant 0 : index
      %c0_16 = arith.constant 0 : index
      %18 = vector.load %arg5[%c0_15, %c0_16] : memref<1x128xf32, #tpu.memory_space<vmem>>, vector<1x128xf32>
      %19 = vector.broadcast %18 : vector<1x128xf32> to vector<8x128xf32>
      %20 = arith.addf %17, %19 : vector<8x128xf32>
      %c0_17 = arith.constant 0 : index
      %c0_18 = arith.constant 0 : index
      %21 = vector.load %arg7[%c0_17, %c0_18] : memref<8x128xf32, #tpu.memory_space<vmem>>, vector<8x128xf32>
      tpu.vector_store %arg7[%c0_17, %c0_18], %20 {strides = array<i32>} : memref<8x128xf32, #tpu.memory_space<vmem>>, vector<8x128xf32>,
    } else {
    }
    return
  }
  func.func @transform_0(%arg0: i32, %arg1: i32, %arg2: i32) -> (i32, i32) {
    %c0_i32 = arith.constant 0 : i32
    return %arg0, %arg2 : i32, i32
  }
  func.func @transform_1(%arg0: i32, %arg1: i32, %arg2: i32) -> (i32, i32) {
    %c0_i32 = arith.constant 0 : i32
    return %arg1, %arg2 : i32, i32
  }
  func.func @transform_2(%arg0: i32, %arg1: i32, %arg2: i32) -> (i32, i32) {
    %c0_i32 = arith.constant 0 : i32
    %c0_i32_0 = arith.constant 0 : i32
    return %c0_i32, %arg1 : i32, i32
  }
  func.func @transform_3(%arg0: i32, %arg1: i32, %arg2: i32) -> (i32, i32) {
    %c0_i32 = arith.constant 0 : i32
    %c0_i32_0 = arith.constant 0 : i32
    return %arg0, %c0_i32 : i32, i32
  }
  func.func @transform_4(%arg0: i32, %arg1: i32, %arg2: i32) -> (i32, i32) {
    %c0_i32 = arith.constant 0 : i32
    return %arg0, %arg1 : i32, i32
  }
}

</mosaic_0001>

<llo_original>
// kernel: tpu_custom_call.1
$region0: #{tpu_custom_call.1}
  #allocation0 [shape = 'u32[]', space=smem, size = 0x4, offset = 0x4, fixed_abs, tag = 'smem constant byte address 0x4 - core index']
  #allocation1 [shape = 'u32[72,128]{1,0:T(1,128)}', space=vmem, size = 0x9000, scoped, tag = 'internal scratch']
  #allocation2 [shape = 'f32[8,128]{1,0:T(8,128)}', space=vmem, size = 0x1000, scoped, tag = 'scratch operand']
  %s0 = inlined_call_operand.vmem [shape: f32[8,128], index: 0, kind: input, shape index: {}]
  %s1 = inlined_call_operand.hbm [shape: f32[128,128], index: 1, kind: input, shape index: {}]
  %s2 = inlined_call_operand.vmem [shape: f32[1,128], index: 2, kind: input, shape index: {}]
  %s3 = inlined_call_operand.vmem [shape: f32[8,1], index: 3, kind: input, shape index: {}]
  %s4 = inlined_call_operand.hbm [shape: f32[8,128], index: 4, kind: output, shape index: {}]
  %s5 = sld [smem:[#allocation0]]
  $region38: #{tpu_custom_call.1} parent=0
    _
  %s7 = ssub.s32 1, %s5
  %s8 = scalar_select 0, %s7, %s5
  $region1: #{tpu_custom_call.1} parent=0
    #allocation3 [shape = 'u8[65536]{0}', space=vmem, size = 0x10000, scoped, tag = 'input window, operand 1, single buffered']
    #allocation4 [shape = 's32[1]{0}', space=sflag, size = 0x4, scoped, tag = 'scoped memory for tpu_custom_call.1']
    #allocation5 [shape = 's32[1]{0}', space=sflag, size = 0x4, scoped, tag = 'scoped memory for tpu_custom_call.1']
    #allocation6 [shape = 'u8[4096]{0}', space=vmem, size = 0x1000, scoped, tag = 'output window, operand 0, single buffered']
    %9 = vsyncpa [#allocation4], 0
    %10 = vsyncpa [#allocation5], 0
    // Predicated region
    $region2: #{tpu_custom_call.1} parent=1 // pred_check
      _
    $region3: #{tpu_custom_call.1} parent=1 // pred_check_branch
      %12 = sbr.rel (0) target = $region5
    $region4: #{tpu_custom_call.1} parent=1 // pred_region
      _
    $region5: #{tpu_custom_call.1} parent=1 // pred_fallthru
      _
    // Predicated region
    $region6: #{tpu_custom_call.1} parent=1 // pred_check
      _
    $region7: #{tpu_custom_call.1} parent=1 // pred_check_branch
      %14 = sbr.rel (0) target = $region9
    $region8: #{tpu_custom_call.1} parent=1 // pred_region
      %16 = vsyncadd [#allocation4], 0
      %s17 = sshll.u32 %s1, 4
      %s18 = int_to_ptr.hbm [resolvable:$true] %s17
      %s19 = sshll.u32 [#allocation3], 4
      %s20 = int_to_ptr.vmem [resolvable:$true] %s19
      %25 = dma.hbm_to_vmem [thread:$0]  %s18, 2048, %s20, [#allocation4], 128, 128, 8
    $region9: #{tpu_custom_call.1} parent=1 // pred_fallthru
      _
    // Predicated region
    $region10: #{tpu_custom_call.1} parent=1 // pred_check
      _
    $region11: #{tpu_custom_call.1} parent=1 // pred_check_branch
      %27 = sbr.rel (0) target = $region13
    $region12: #{tpu_custom_call.1} parent=1 // pred_region
      _
    $region13: #{tpu_custom_call.1} parent=1 // pred_fallthru
      _
    // Predicated region
    $region14: #{tpu_custom_call.1} parent=1 // pred_check
      _
    $region15: #{tpu_custom_call.1} parent=1 // pred_check_branch
      %29 = sbr.rel (0) target = $region17
    $region16: #{tpu_custom_call.1} parent=1 // pred_region
      _
    $region17: #{tpu_custom_call.1} parent=1 // pred_fallthru
      _
    // Predicated region
    $region18: #{tpu_custom_call.1} parent=1 // pred_check
      _
    $region19: #{tpu_custom_call.1} parent=1 // pred_check_branch
      %31 = sbr.rel (0) target = $region21
    $region20: #{tpu_custom_call.1} parent=1 // pred_region
      %33 = dma.done [#allocation4], 2048
    $region21: #{tpu_custom_call.1} parent=1 // pred_fallthru
      _
    %p34 = scmp.eq.s32.totalorder 0, 0
    // Predicated region
    $region22: #{tpu_custom_call.1} parent=1 // pred_check
      %p35 = pneg %p34
    $region23: #{tpu_custom_call.1} parent=1 // pred_check_branch
      %37 = sbr.rel (%p35) target = $region25
    $region24: #{tpu_custom_call.1} parent=1 // pred_region
      %38 = vst [vmem:[#allocation2] sm:$0xff] 0.0
    $region25: #{tpu_custom_call.1} parent=1 // pred_fallthru
      _
    %v39 = vld [vmem:[#allocation2] sm:$0xff]
    %v40 = vld [vmem:[%s0] sm:$0xff]
    %v41 = vld [vmem:[#allocation3] sm:$0xff]
    %v42 = vld [vmem:[#allocation3 + $0x8] sm:$0xff]
    %v43 = vld [vmem:[#allocation3 + $0x10] sm:$0xff]
    %v44 = vld [vmem:[#allocation3 + $0x18] sm:$0xff]
    %v45 = vld [vmem:[#allocation3 + $0x20] sm:$0xff]
    %v46 = vld [vmem:[#allocation3 + $0x28] sm:$0xff]
    %v47 = vld [vmem:[#allocation3 + $0x30] sm:$0xff]
    %v48 = vld [vmem:[#allocation3 + $0x38] sm:$0xff]
    %v49 = vld [vmem:[#allocation3 + $0x40] sm:$0xff]
    %v50 = vld [vmem:[#allocation3 + $0x48] sm:$0xff]
    %v51 = vld [vmem:[#allocation3 + $0x50] sm:$0xff]
    %v52 = vld [vmem:[#allocation3 + $0x58] sm:$0xff]
    %v53 = vld [vmem:[#allocation3 + $0x60] sm:$0xff]
    %v54 = vld [vmem:[#allocation3 + $0x68] sm:$0xff]
    %v55 = vld [vmem:[#allocation3 + $0x70] sm:$0xff]
    %v56 = vld [vmem:[#allocation3 + $0x78] sm:$0xff]
    %57 = vmatpush.xpose.msra.mxu0 %v56
    %58 = vmatpush.xpose.msra.mxu0 %v55
    %59 = vmatpush.xpose.msra.mxu0 %v54
    %60 = vmatpush.xpose.msra.mxu0 %v53
    %61 = vmatpush.xpose.msra.mxu0 %v52
    %62 = vmatpush.xpose.msra.mxu0 %v51
    %63 = vmatpush.xpose.msra.mxu0 %v50
    %64 = vmatpush.xpose.msra.mxu0 %v49
    %65 = vmatpush.xpose.msra.mxu0 %v48
    %66 = vmatpush.xpose.msra.mxu0 %v47
    %67 = vmatpush.xpose.msra.mxu0 %v46
    %68 = vmatpush.xpose.msra.mxu0 %v45
    %69 = vmatpush.xpose.msra.mxu0 %v44
    %70 = vmatpush.xpose.msra.mxu0 %v43
    %71 = vmatpush.xpose.msra.mxu0 %v42
    %72 = vmatpush.xpose.msra.mxu0 %v41
    %73 = vmatmul.f32.gmra.mxu0 %v40
    %v74 = vpop.f32.mrf.mxu0
    %v75 = vadd.f32 0.0, %v74
    %76 = vdwg.mxu0
    %v77 = vadd.f32 %v39, %v75
    %78 = vst [vmem:[#allocation2] sm:$0xff] %v77
    // Predicated region
    $region26: #{tpu_custom_call.1} parent=1 // pred_check
      %p79 = pneg %p34
    $region27: #{tpu_custom_call.1} parent=1 // pred_check_branch
      %81 = sbr.rel (%p79) target = $region29
    $region28: #{tpu_custom_call.1} parent=1 // pred_region
      %v82 = vld [vmem:[#allocation2] sm:$0xff]
      %v83 = vmul.f32 %v82, 0.0625
      %v84 = vld [vmem:[%s3] sm:$0xff]
      %86 = vset.pattern.permute.xlu0 0
      %87 = vperm.xlu0 %86, %v84
      %v88 = vpop.permute.xlu0 %87
      %v90 = vadd.f32 %v83, %v88
      %v91 = vld [vmem:[%s2] sm:$0x1]
      %v93 = vperm.slane %v91, 0
      %v95 = vadd.f32 %v90, %v93
      %96 = vst [vmem:[#allocation6] sm:$0xff] %v95
    $region29: #{tpu_custom_call.1} parent=1 // pred_fallthru
      _
    // Predicated region
    $region30: #{tpu_custom_call.1} parent=1 // pred_check
      _
    $region31: #{tpu_custom_call.1} parent=1 // pred_check_branch
      %98 = sbr.rel (0) target = $region33
    $region32: #{tpu_custom_call.1} parent=1 // pred_region
      %100 = vsyncadd [#allocation5], 0
      %s102 = sshll.u32 [#allocation6], 4
      %s103 = int_to_ptr.vmem [resolvable:$true] %s102
      %s104 = sshll.u32 %s4, 4
      %s105 = int_to_ptr.hbm [resolvable:$true] %s104
      %107 = dma.vmem_to_hbm [thread:$0]  %s103, 128, %s105, [#allocation5]
    $region33: #{tpu_custom_call.1} parent=1 // pred_fallthru
      _
    // Predicated region
    $region34: #{tpu_custom_call.1} parent=1 // pred_check
      _
    $region35: #{tpu_custom_call.1} parent=1 // pred_check_branch
      %109 = sbr.rel (0) target = $region37
    $region36: #{tpu_custom_call.1} parent=1 // pred_region
      %111 = dma.done [#allocation5], 128
    $region37: #{tpu_custom_call.1} parent=1 // pred_fallthru
      _
    %112 = vsyncpa [#allocation4], 1
    %113 = vsyncpa [#allocation5], 1

</llo_original>
